<compile_context>
chip_gen: v5e
topology: v5e:2x2
jax: 0.10.0
libtpu: 0.0.40
codegen_flags: <defaults>
</compile_context>

<pallas_src>
import functools

import jax
import jax.numpy as jnp
from jax.experimental import pallas as pl
from jax.experimental.pallas import tpu as pltpu


def _vit_embed_kernel(p_ref, w_ref, addp_ref, cls_ref, o_ref):
    # p_ref:    [TB, NP, K]     bf16  im2col patches for TB images
    # w_ref:    [K, D]          bf16  patch-embedding weight (grid invariant)
    # addp_ref: [NP, D]         f32   conv bias + positional rows 0..NP-1 (grid invariant)
    # cls_ref:  [1, D]          f32   class_token + positional row NP     (grid invariant)
    # o_ref:    [TB, NP+1, D]   out dtype, final z0 rows for TB images
    tb, np_, _ = p_ref.shape
    w = w_ref[...]
    addp = addp_ref[...]
    cls_row = cls_ref[...].astype(o_ref.dtype)
    for t in range(tb):  # static unroll: TB is a small compile-time constant
        acc = jnp.dot(p_ref[t], w, preferred_element_type=jnp.float32)   # [NP, D] f32
        o_ref[t, 0:np_, :] = (acc + addp).astype(o_ref.dtype)            # patch tokens
        o_ref[t, np_:np_ + 1, :] = cls_row                               # class token (last row)


def _choose_batch_tile(b, num_patch, k_dim, d_dim, out_bytes, *,
                       target_rows=1024, vmem_budget=36 * 1024 * 1024):
    """Largest TB that divides B, keeps ~<=1024 output rows per step, fits VMEM
    (double-buffered patches + output, single-copy invariants), and leaves a grid of
    length >= 2 whenever B >= 2 (both v7x TensorCores)."""
    def est(tb):
        return (2 * tb * num_patch * k_dim * 2                       # bf16 patches, 2 bufs
                + 2 * tb * (num_patch + 1) * d_dim * out_bytes       # output, 2 bufs
                + k_dim * d_dim * 2 + num_patch * d_dim * 4 + d_dim * 4)  # invariants
    best = 1
    for tb in range(1, b + 1):
        if b % tb != 0:
            continue
        if tb > 1 and tb * num_patch > target_rows:
            break
        if est(tb) > vmem_budget:
            break
        if b >= 2 and b // tb < 2:
            break
        best = tb
    return best


@functools.partial(jax.jit, static_argnames=("single_buffer_invariants",))
def vit_input_layer(x, conv_w, conv_b, class_token, pos_emb, *,
                    single_buffer_invariants=True):
    """x: [B, C, H, W] (NCHW). Returns z_0: [B, NP+1, D] with the class token appended
    last (matching torch.cat((x, class_token), dim=1)) and pos_emb added."""
    B, C, H, W = x.shape
    D, Cw, P, Pw = conv_w.shape
    assert C == Cw and P == Pw and H % P == 0 and W % P == 0
    nr_h, nr_w = H // P, W // P
    NP = nr_h * nr_w
    K = C * P * P

    compute_dtype = jnp.bfloat16
    out_dtype = x.dtype
    out_bytes = jnp.dtype(out_dtype).itemsize

    # im2col patch extraction (bf16 cast fused into the transpose under jit):
    # [B, NP, K] with (C, kh, kw) flatten order, matching Conv2d weight [D, C, P, P].
    patches = x.astype(compute_dtype).reshape(B, C, nr_h, P, nr_w, P)
    patches = patches.transpose(0, 2, 4, 1, 3, 5).reshape(B, NP, K)

    # Conv weight [D, C, P, P] -> [K, D] so patches @ W == the strided conv output.
    w_mat = conv_w.reshape(D, K).T.astype(compute_dtype)
    # Fold conv bias into the patch positional rows; fold class_token into pos row NP.
    add_patch = (pos_emb[0, :NP, :] + conv_b[None, :]).astype(jnp.float32)            # [NP, D]
    cls_row = (class_token[0, 0, :] + pos_emb[0, NP, :]).reshape(1, D).astype(jnp.float32)

    TB = _choose_batch_tile(B, NP, K, D, out_bytes)
    grid = (B // TB,)

    if single_buffer_invariants:
        # Constant index_map -> never re-DMA'd across steps; single-buffer so they do
        # not reserve 2x VMEM (matters for large K*D configs on v7x's 64 MiB part).
        def inv_spec(shape):
            return pl.BlockSpec(shape, lambda b: (0, 0), pipeline_mode=pl.Buffered(1))
    else:
        def inv_spec(shape):
            return pl.BlockSpec(shape, lambda b: (0, 0))

    cost = pl.CostEstimate(
        flops=2 * B * NP * K * D,
        transcendentals=0,
        bytes_accessed=(B * NP * K * 2 + K * D * 2 + NP * D * 4 + D * 4
                        + B * (NP + 1) * D * out_bytes),
    )

    z0 = pl.pallas_call(
        _vit_embed_kernel,
        out_shape=jax.ShapeDtypeStruct((B, NP + 1, D), out_dtype),
        grid_spec=pltpu.PrefetchScalarGridSpec(
            num_scalar_prefetch=0,
            grid=grid,
            in_specs=[
                pl.BlockSpec((TB, NP, K), lambda b: (b, 0, 0)),
                inv_spec((K, D)),
                inv_spec((NP, D)),
                inv_spec((1, D)),
            ],
            out_specs=pl.BlockSpec((TB, NP + 1, D), lambda b: (b, 0, 0)),
        ),
        compiler_params=pltpu.CompilerParams(
            dimension_semantics=("parallel",),
            vmem_limit_bytes=48 * 1024 * 1024,
        ),
        cost_estimate=cost,
    )(patches, w_mat, add_patch, cls_row)
    return z0


def _reference(x, conv_w, conv_b, class_token, pos_emb):
    """Independent f32 reference using lax.conv (mirrors the PyTorch forward)."""
    P = conv_w.shape[-1]
    y = jax.lax.conv_general_dilated(
        x, conv_w, window_strides=(P, P), padding="VALID",
        dimension_numbers=("NCHW", "OIHW", "NCHW"),
    ) + conv_b.reshape(1, -1, 1, 1)                     # [B, D, nr, nr]
    B, D = y.shape[0], y.shape[1]
    y = y.reshape(B, D, -1).transpose(0, 2, 1)          # [B, NP, D]
    cls = jnp.broadcast_to(class_token, (B, 1, D))
    return jnp.concatenate([y, cls], axis=1) + pos_emb  # [B, NP+1, D]


if __name__ == "__main__":
    # Small shapes consistent with the module: B=2, C=4, image=16, num_patch_row=2 -> P=8, NP=4, D=32
    B, C, IMG, NPR, D = 2, 4, 16, 2, 32
    P = IMG // NPR
    NP = NPR * NPR

    key = jax.random.PRNGKey(0)
    kx, kw, kb, kc, kp = jax.random.split(key, 5)
    x = jax.random.normal(kx, (B, C, IMG, IMG), dtype=jnp.float32)
    conv_w = jax.random.normal(kw, (D, C, P, P), dtype=jnp.float32) * 0.02
    conv_b = jax.random.normal(kb, (D,), dtype=jnp.float32) * 0.02
    class_token = jax.random.normal(kc, (1, 1, D), dtype=jnp.float32)
    pos_emb = jax.random.normal(kp, (1, NP + 1, D), dtype=jnp.float32)

    try:
        z0 = jax.block_until_ready(
            vit_input_layer(x, conv_w, conv_b, class_token, pos_emb,
                            single_buffer_invariants=True))
    except Exception:
        # Fallback if this JAX build rejects pl.Buffered(1) single-buffering of the
        # grid-invariant operands; everything else is identical.
        z0 = jax.block_until_ready(
            vit_input_layer(x, conv_w, conv_b, class_token, pos_emb,
                            single_buffer_invariants=False))

    ref = _reference(x, conv_w, conv_b, class_token, pos_emb)
    assert z0.shape == (B, NP + 1, D)
    # bf16 matmul operands (f32 accumulation) vs. the pure-f32 conv reference.
    assert jnp.allclose(z0, ref, atol=2e-2, rtol=2e-2), "mismatch vs reference"
    print("KERNEL_OK")
</pallas_src>

<mosaic_0001>
module attributes {stable_mosaic.version = 11 : i64} {
  func.func @_vit_embed_kernel(%arg0: i32, %arg1: memref<1x4x256xbf16, #tpu.memory_space<vmem>>, %arg2: memref<256x32xbf16, #tpu.memory_space<vmem>>, %arg3: memref<4x32xf32, #tpu.memory_space<vmem>>, %arg4: memref<1x32xf32, #tpu.memory_space<vmem>>, %arg5: memref<1x5x32xf32, #tpu.memory_space<vmem>>) attributes {dimension_semantics = [#tpu.dimension_semantics<parallel>], iteration_bounds = array<i64: 2>, scalar_prefetch = 0 : i64, scratch_operands = 0 : i64, tpu.core_type = #tpu.core_type<tc>, window_params = [{transform_indices = @transform_0, window_bounds = array<i64: 1, 4, 256>}, {pipeline_mode = #tpu.pipeline_mode<synchronous>, transform_indices = @transform_1, window_bounds = array<i64: 256, 32>}, {pipeline_mode = #tpu.pipeline_mode<synchronous>, transform_indices = @transform_2, window_bounds = array<i64: 4, 32>}, {pipeline_mode = #tpu.pipeline_mode<synchronous>, transform_indices = @transform_3, window_bounds = array<i64: 1, 32>}, {transform_indices = @transform_4, window_bounds = array<i64: 1, 5, 32>}]} {
    %c0 = arith.constant 0 : index
    %c0_0 = arith.constant 0 : index
    %0 = vector.load %arg2[%c0, %c0_0] : memref<256x32xbf16, #tpu.memory_space<vmem>>, vector<256x32xbf16>
    %c0_1 = arith.constant 0 : index
    %c0_2 = arith.constant 0 : index
    %1 = vector.load %arg3[%c0_1, %c0_2] : memref<4x32xf32, #tpu.memory_space<vmem>>, vector<4x32xf32>
    %c0_3 = arith.constant 0 : index
    %c0_4 = arith.constant 0 : index
    %2 = vector.load %arg4[%c0_3, %c0_4] : memref<1x32xf32, #tpu.memory_space<vmem>>, vector<1x32xf32>
    %c0_5 = arith.constant 0 : index
    %c0_6 = arith.constant 0 : index
    %c0_7 = arith.constant 0 : index
    %3 = vector.load %arg1[%c0_5, %c0_6, %c0_7] : memref<1x4x256xbf16, #tpu.memory_space<vmem>>, vector<1x4x256xbf16>
    %4 = vector.shape_cast %3 : vector<1x4x256xbf16> to vector<4x256xbf16>
    %cst = arith.constant dense<0.000000e+00> : vector<4x32xf32>
    %5 = tpu.matmul %4, %0, %cst {dimension_numbers = #tpu.dot_dimension_numbers<[1], [0], [0], [1], [0, 0, 1, 1], [], []>} : vector<4x256xbf16>, vector<256x32xbf16>, vector<4x32xf32> -> vector<4x32xf32>
    %6 = arith.addf %5, %1 : vector<4x32xf32>
    %c0_8 = arith.constant 0 : index
    %c0_9 = arith.constant 0 : index
    %c0_10 = arith.constant 0 : index
    %7 = vector.load %arg5[%c0_8, %c0_9, %c0_10] : memref<1x5x32xf32, #tpu.memory_space<vmem>>, vector<1x4x32xf32>
    %8 = vector.shape_cast %7 : vector<1x4x32xf32> to vector<4x32xf32>
    %9 = vector.shape_cast %6 : vector<4x32xf32> to vector<1x4x32xf32>
    tpu.vector_store %arg5[%c0_8, %c0_9, %c0_10], %9 {strides = array<i32>} : memref<1x5x32xf32, #tpu.memory_space<vmem>>, vector<1x4x32xf32>,
    %c0_11 = arith.constant 0 : index
    %c4 = arith.constant 4 : index
    %c0_12 = arith.constant 0 : index
    %10 = vector.load %arg5[%c0_11, %c4, %c0_12] : memref<1x5x32xf32, #tpu.memory_space<vmem>>, vector<1x1x32xf32>
    %11 = vector.shape_cast %10 : vector<1x1x32xf32> to vector<1x32xf32>
    %12 = vector.shape_cast %2 : vector<1x32xf32> to vector<1x1x32xf32>
    tpu.vector_store %arg5[%c0_11, %c4, %c0_12], %12 {strides = array<i32>} : memref<1x5x32xf32, #tpu.memory_space<vmem>>, vector<1x1x32xf32>,
    return
  }
  func.func @transform_0(%arg0: i32) -> (i32, i32, i32) {
    %c0_i32 = arith.constant 0 : i32
    %c0_i32_0 = arith.constant 0 : i32
    %c0_i32_1 = arith.constant 0 : i32
    return %arg0, %c0_i32, %c0_i32_0 : i32, i32, i32
  }
  func.func @transform_1(%arg0: i32) -> (i32, i32) {
    %c0_i32 = arith.constant 0 : i32
    %c0_i32_0 = arith.constant 0 : i32
    %c0_i32_1 = arith.constant 0 : i32
    return %c0_i32, %c0_i32_0 : i32, i32
  }
  func.func @transform_2(%arg0: i32) -> (i32, i32) {
    %c0_i32 = arith.constant 0 : i32
    %c0_i32_0 = arith.constant 0 : i32
    %c0_i32_1 = arith.constant 0 : i32
    return %c0_i32, %c0_i32_0 : i32, i32
  }
  func.func @transform_3(%arg0: i32) -> (i32, i32) {
    %c0_i32 = arith.constant 0 : i32
    %c0_i32_0 = arith.constant 0 : i32
    %c0_i32_1 = arith.constant 0 : i32
    return %c0_i32, %c0_i32_0 : i32, i32
  }
  func.func @transform_4(%arg0: i32) -> (i32, i32, i32) {
    %c0_i32 = arith.constant 0 : i32
    %c0_i32_0 = arith.constant 0 : i32
    %c0_i32_1 = arith.constant 0 : i32
    return %arg0, %c0_i32, %c0_i32_0 : i32, i32, i32
  }
}

module attributes {stable_mosaic.version = 11 : i64} {
  func.func @_vit_embed_kernel(%arg0: i32, %arg1: memref<1x4x256xbf16, #tpu.memory_space<vmem>>, %arg2: memref<256x32xbf16, #tpu.memory_space<vmem>>, %arg3: memref<4x32xf32, #tpu.memory_space<vmem>>, %arg4: memref<1x32xf32, #tpu.memory_space<vmem>>, %arg5: memref<1x5x32xf32, #tpu.memory_space<vmem>>) attributes {dimension_semantics = [#tpu.dimension_semantics<parallel>], iteration_bounds = array<i64: 2>, scalar_prefetch = 0 : i64, scratch_operands = 0 : i64, tpu.core_type = #tpu.core_type<tc>, window_params = [{transform_indices = @transform_0, window_bounds = array<i64: 1, 4, 256>}, {pipeline_mode = #tpu.pipeline_mode<synchronous>, transform_indices = @transform_1, window_bounds = array<i64: 256, 32>}, {pipeline_mode = #tpu.pipeline_mode<synchronous>, transform_indices = @transform_2, window_bounds = array<i64: 4, 32>}, {pipeline_mode = #tpu.pipeline_mode<synchronous>, transform_indices = @transform_3, window_bounds = array<i64: 1, 32>}, {transform_indices = @transform_4, window_bounds = array<i64: 1, 5, 32>}]} {
    %c0 = arith.constant 0 : index
    %c0_0 = arith.constant 0 : index
    %0 = vector.load %arg2[%c0, %c0_0] : memref<256x32xbf16, #tpu.memory_space<vmem>>, vector<256x32xbf16>
    %c0_1 = arith.constant 0 : index
    %c0_2 = arith.constant 0 : index
    %1 = vector.load %arg3[%c0_1, %c0_2] : memref<4x32xf32, #tpu.memory_space<vmem>>, vector<4x32xf32>
    %c0_3 = arith.constant 0 : index
    %c0_4 = arith.constant 0 : index
    %2 = vector.load %arg4[%c0_3, %c0_4] : memref<1x32xf32, #tpu.memory_space<vmem>>, vector<1x32xf32>
    %c0_5 = arith.constant 0 : index
    %c0_6 = arith.constant 0 : index
    %c0_7 = arith.constant 0 : index
    %3 = vector.load %arg1[%c0_5, %c0_6, %c0_7] : memref<1x4x256xbf16, #tpu.memory_space<vmem>>, vector<1x4x256xbf16>
    %4 = vector.shape_cast %3 : vector<1x4x256xbf16> to vector<4x256xbf16>
    %cst = arith.constant dense<0.000000e+00> : vector<4x32xf32>
    %5 = tpu.matmul %4, %0, %cst {dimension_numbers = #tpu.dot_dimension_numbers<[1], [0], [0], [1], [0, 0, 1, 1], [], []>} : vector<4x256xbf16>, vector<256x32xbf16>, vector<4x32xf32> -> vector<4x32xf32>
    %6 = arith.addf %5, %1 : vector<4x32xf32>
    %c0_8 = arith.constant 0 : index
    %c0_9 = arith.constant 0 : index
    %c0_10 = arith.constant 0 : index
    %7 = vector.load %arg5[%c0_8, %c0_9, %c0_10] : memref<1x5x32xf32, #tpu.memory_space<vmem>>, vector<1x4x32xf32>
    %8 = vector.shape_cast %7 : vector<1x4x32xf32> to vector<4x32xf32>
    %9 = vector.shape_cast %6 : vector<4x32xf32> to vector<1x4x32xf32>
    tpu.vector_store %arg5[%c0_8, %c0_9, %c0_10], %9 {strides = array<i32>} : memref<1x5x32xf32, #tpu.memory_space<vmem>>, vector<1x4x32xf32>,
    %c0_11 = arith.constant 0 : index
    %c4 = arith.constant 4 : index
    %c0_12 = arith.constant 0 : index
    %10 = vector.load %arg5[%c0_11, %c4, %c0_12] : memref<1x5x32xf32, #tpu.memory_space<vmem>>, vector<1x1x32xf32>
    %11 = vector.shape_cast %10 : vector<1x1x32xf32> to vector<1x32xf32>
    %12 = vector.shape_cast %2 : vector<1x32xf32> to vector<1x1x32xf32>
    tpu.vector_store %arg5[%c0_11, %c4, %c0_12], %12 {strides = array<i32>} : memref<1x5x32xf32, #tpu.memory_space<vmem>>, vector<1x1x32xf32>,
    return
  }
  func.func @transform_0(%arg0: i32) -> (i32, i32, i32) {
    %c0_i32 = arith.constant 0 : i32
    %c0_i32_0 = arith.constant 0 : i32
    %c0_i32_1 = arith.constant 0 : i32
    return %arg0, %c0_i32, %c0_i32_0 : i32, i32, i32
  }
  func.func @transform_1(%arg0: i32) -> (i32, i32) {
    %c0_i32 = arith.constant 0 : i32
    %c0_i32_0 = arith.constant 0 : i32
    %c0_i32_1 = arith.constant 0 : i32
    return %c0_i32, %c0_i32_0 : i32, i32
  }
  func.func @transform_2(%arg0: i32) -> (i32, i32) {
    %c0_i32 = arith.constant 0 : i32
    %c0_i32_0 = arith.constant 0 : i32
    %c0_i32_1 = arith.constant 0 : i32
    return %c0_i32, %c0_i32_0 : i32, i32
  }
  func.func @transform_3(%arg0: i32) -> (i32, i32) {
    %c0_i32 = arith.constant 0 : i32
    %c0_i32_0 = arith.constant 0 : i32
    %c0_i32_1 = arith.constant 0 : i32
    return %c0_i32, %c0_i32_0 : i32, i32
  }
  func.func @transform_4(%arg0: i32) -> (i32, i32, i32) {
    %c0_i32 = arith.constant 0 : i32
    %c0_i32_0 = arith.constant 0 : i32
    %c0_i32_1 = arith.constant 0 : i32
    return %arg0, %c0_i32, %c0_i32_0 : i32, i32, i32
  }
}

</mosaic_0001>

<llo_original>
// kernel: vit_input_layer.1
$region0: #{vit_input_layer.1}
  #allocation0 [shape = 'u32[]', space=smem, size = 0x4, offset = 0x4, fixed_abs, tag = 'smem constant byte address 0x4 - core index']
  #allocation1 [shape = 'u32[72,128]{1,0:T(1,128)}', space=vmem, size = 0x9000, scoped, tag = 'internal scratch']
  %s0 = inlined_call_operand.vmem [shape: bf16[2,4,256], index: 0, kind: input, shape index: {}]
  %s1 = inlined_call_operand.vmem [shape: bf16[256,32], index: 1, kind: input, shape index: {}]
  %s2 = inlined_call_operand.vmem [shape: f32[4,32], index: 2, kind: input, shape index: {}]
  %s3 = inlined_call_operand.vmem [shape: f32[1,32], index: 3, kind: input, shape index: {}]
  %s4 = inlined_call_operand.vmem [shape: f32[2,5,32], index: 4, kind: output, shape index: {}]
  %s5 = sld [smem:[#allocation0]]
  $region49: #{vit_input_layer.1} parent=0
    _
  %s7 = ssub.s32 1, %s5
  %s8 = scalar_select 0, %s7, %s5
  loop: start=0, step=1, limit=4
  $region2: #{vit_input_layer.1} parent=0 // loop_pre_header
    _
  $region3: #{vit_input_layer.1} parent=0 // loop_header
    %s10 = sphi 0, %s14
    %p11 = scmp.ge.s32.totalorder %s10, 4
    %s20 = sphi 0, %s22
    %s23 = sphi 0, %s20
    %s24 = sphi 0, %s23
    %s40 = sphi 0, %s24
    %s44 = sphi 0, %s44
    %s46 = sphi 0, %s44
    %s47 = sphi 0, %s46
    %s61 = sphi 0, %s47
    %s65 = sphi 0, %s65
    %s67 = sphi 0, %s65
    %s68 = sphi 0, %s67
    %s82 = sphi 0, %s68
    %s86 = sphi 0, %s86
    %s88 = sphi 0, %s86
    %s89 = sphi 0, %s88
    %s103 = sphi 0, %s89
    %s109 = sphi 0, %s111
    %s112 = sphi 0, %s109
    %s113 = sphi 0, %s112
    %s129 = sphi 0, %s113
  $region4: #{vit_input_layer.1} parent=0 // loop_header_branch
    %13 = sbr.rel (%p11) target = $region8
  $region5: #{vit_input_layer.1} parent=0 // loop_body
    %s15 = ssub.s32 %s10, 1
    %s16 = ssub.s32 %s10, 2
    %s17 = sadd.s32 %s10, 1
    %s18 = ssub.s32 %s10, %s17
    %p19 = scmp.eq.s32.totalorder %s18, 0
    %s21 = sadd.s32 %s20, 1
    %s22 = scalar_select %p19, %s20, %s21
    %p25 = pneg %p19
    %p26 = scmp.eq.s32.totalorder %s10, 1
    %p27 = por %p25, %p26
    %p28 = scmp.ne.s32.totalorder %s20, %s23
    %p29 = scmp.eq.s32.totalorder %s10, 0
    %p30 = por %p28, %p29
    %p31 = scmp.ne.s32.totalorder %s20, %s23
    %p32 = scmp.eq.s32.totalorder %s15, 1
    %p33 = por %p31, %p32
    %p34 = scmp.ne.s32.totalorder %s23, %s24
    %p35 = scmp.eq.s32.totalorder %s15, 0
    %p36 = por %p34, %p35
    %p37 = scmp.ne.s32.totalorder %s23, %s24
    %p38 = scmp.eq.s32.totalorder %s16, 1
    %p39 = por %p37, %p38
    %p41 = scmp.ne.s32.totalorder %s24, %s40
    %p42 = scmp.eq.s32.totalorder %s16, 0
    %p43 = por %p41, %p42
    %s45 = sadd.s32 %s44, 1
    %p48 = scmp.eq.s32.totalorder %s10, 1
    %p49 = scmp.ne.s32.totalorder %s44, %s46
    %p50 = scmp.eq.s32.totalorder %s10, 0
    %p51 = por %p49, %p50
    %p52 = scmp.ne.s32.totalorder %s44, %s46
    %p53 = scmp.eq.s32.totalorder %s15, 1
    %p54 = por %p52, %p53
    %p55 = scmp.ne.s32.totalorder %s46, %s47
    %p56 = scmp.eq.s32.totalorder %s15, 0
    %p57 = por %p55, %p56
    %p58 = scmp.ne.s32.totalorder %s46, %s47
    %p59 = scmp.eq.s32.totalorder %s16, 1
    %p60 = por %p58, %p59
    %p62 = scmp.ne.s32.totalorder %s47, %s61
    %p63 = scmp.eq.s32.totalorder %s16, 0
    %p64 = por %p62, %p63
    %s66 = sadd.s32 %s65, 1
    %p69 = scmp.eq.s32.totalorder %s10, 1
    %p70 = scmp.ne.s32.totalorder %s65, %s67
    %p71 = scmp.eq.s32.totalorder %s10, 0
    %p72 = por %p70, %p71
    %p73 = scmp.ne.s32.totalorder %s65, %s67
    %p74 = scmp.eq.s32.totalorder %s15, 1
    %p75 = por %p73, %p74
    %p76 = scmp.ne.s32.totalorder %s67, %s68
    %p77 = scmp.eq.s32.totalorder %s15, 0
    %p78 = por %p76, %p77
    %p79 = scmp.ne.s32.totalorder %s67, %s68
    %p80 = scmp.eq.s32.totalorder %s16, 1
    %p81 = por %p79, %p80
    %p83 = scmp.ne.s32.totalorder %s68, %s82
    %p84 = scmp.eq.s32.totalorder %s16, 0
    %p85 = por %p83, %p84
    %s87 = sadd.s32 %s86, 1
    %p90 = scmp.eq.s32.totalorder %s10, 1
    %p91 = scmp.ne.s32.totalorder %s86, %s88
    %p92 = scmp.eq.s32.totalorder %s10, 0
    %p93 = por %p91, %p92
    %p94 = scmp.ne.s32.totalorder %s86, %s88
    %p95 = scmp.eq.s32.totalorder %s15, 1
    %p96 = por %p94, %p95
    %p97 = scmp.ne.s32.totalorder %s88, %s89
    %p98 = scmp.eq.s32.totalorder %s15, 0
    %p99 = por %p97, %p98
    %p100 = scmp.ne.s32.totalorder %s88, %s89
    %p101 = scmp.eq.s32.totalorder %s16, 1
    %p102 = por %p100, %p101
    %p104 = scmp.ne.s32.totalorder %s89, %s103
    %p105 = scmp.eq.s32.totalorder %s16, 0
    %p106 = por %p104, %p105
    %s107 = ssub.s32 %s10, %s17
    %p108 = scmp.eq.s32.totalorder %s107, 0
    %s110 = sadd.s32 %s109, 1
    %s111 = scalar_select %p108, %s109, %s110
    %p114 = pneg %p108
    %p115 = scmp.eq.s32.totalorder %s10, 1
    %p116 = por %p114, %p115
    %p117 = scmp.ne.s32.totalorder %s109, %s112
    %p118 = scmp.eq.s32.totalorder %s10, 0
    %p119 = por %p117, %p118
    %p120 = scmp.ne.s32.totalorder %s109, %s112
    %p121 = scmp.eq.s32.totalorder %s15, 1
    %p122 = por %p120, %p121
    %p123 = scmp.ne.s32.totalorder %s112, %s113
    %p124 = scmp.eq.s32.totalorder %s15, 0
    %p125 = por %p123, %p124
    %p126 = scmp.ne.s32.totalorder %s112, %s113
    %p127 = scmp.eq.s32.totalorder %s16, 1
    %p128 = por %p126, %p127
    %p130 = scmp.ne.s32.totalorder %s113, %s129
    %p131 = scmp.eq.s32.totalorder %s16, 0
    %p132 = por %p130, %p131
    %p133 = scmp.le.s32.totalorder 1, %s10
    %p134 = scmp.lt.s32.totalorder %s10, 3
    %p135 = pnand %p133, %p134
    %p136 = pneg %p135
    // Predicated region
    $region9: #{vit_input_layer.1} parent=5 // pred_check
      _
    $region10: #{vit_input_layer.1} parent=5 // pred_check_branch
      %138 = sbr.rel (%p135) target = $region12
    $region11: #{vit_input_layer.1} parent=5 // pred_region
      %s139 = ssub.s32 %s10, 1
      // Predicated region
      $region13: #{vit_input_layer.1} parent=11 // pred_check
        %p140 = pneg %p57
      $region14: #{vit_input_layer.1} parent=11 // pred_check_branch
        %142 = sbr.rel (%p140) target = $region16
      $region15: #{vit_input_layer.1} parent=11 // pred_region
        _
      $region16: #{vit_input_layer.1} parent=11 // pred_fallthru
        _
      // Predicated region
      $region17: #{vit_input_layer.1} parent=11 // pred_check
        %p143 = pneg %p78
      $region18: #{vit_input_layer.1} parent=11 // pred_check_branch
        %145 = sbr.rel (%p143) target = $region20
      $region19: #{vit_input_layer.1} parent=11 // pred_region
        _
      $region20: #{vit_input_layer.1} parent=11 // pred_fallthru
        _
      // Predicated region
      $region21: #{vit_input_layer.1} parent=11 // pred_check
        %p146 = pneg %p99
      $region22: #{vit_input_layer.1} parent=11 // pred_check_branch
        %148 = sbr.rel (%p146) target = $region24
      $region23: #{vit_input_layer.1} parent=11 // pred_region
        _
      $region24: #{vit_input_layer.1} parent=11 // pred_fallthru
        _
    $region12: #{vit_input_layer.1} parent=5 // pred_fallthru
      _
    %p149 = scmp.lt.s32.totalorder %s10, 2
    // Predicated region
    $region25: #{vit_input_layer.1} parent=5 // pred_check
      %p150 = pneg %p149
    $region26: #{vit_input_layer.1} parent=5 // pred_check_branch
      %152 = sbr.rel (%p150) target = $region28
    $region27: #{vit_input_layer.1} parent=5 // pred_region
      // Predicated region
      $region29: #{vit_input_layer.1} parent=27 // pred_check
        %p153 = pneg %p30
      $region30: #{vit_input_layer.1} parent=27 // pred_check_branch
        %155 = sbr.rel (%p153) target = $region32
      $region31: #{vit_input_layer.1} parent=27 // pred_region
        %p156 = scmp.lt.s32.totalorder %s10, 1
        %s157 = scalar_select %p156, %s10, 1
        %s158 = smul.addr %s157, 2
        %s159 = smul.addr %s158, 2
        %s160 = scalar_lea.vmem %s0, %s159
      $region32: #{vit_input_layer.1} parent=27 // pred_fallthru
        _
    $region28: #{vit_input_layer.1} parent=5 // pred_fallthru
      _
    %p161 = scmp.le.s32.totalorder 1, %s10
    %p162 = scmp.lt.s32.totalorder %s10, 3
    %p163 = pnand %p161, %p162
    %p164 = pneg %p163
    // Predicated region
    $region33: #{vit_input_layer.1} parent=5 // pred_check
      _
    $region34: #{vit_input_layer.1} parent=5 // pred_check_branch
      %166 = sbr.rel (%p163) target = $region36
    $region35: #{vit_input_layer.1} parent=5 // pred_region
      %s167 = ssub.s32 %s10, 1
      %p168 = scmp.lt.s32.totalorder %s15, 1
      %s169 = scalar_select %p168, %s15, 1
      %s170 = smul.addr %s169, 2
      %s171 = smul.addr %s170, 2
      %s172 = scalar_lea.vmem %s0, %s171
      %p173 = pneg %p36
      %p174 = pneg %p33
      %p175 = pneg %p57
      %p176 = pneg %p54
      %p177 = pneg %p78
      %p178 = pneg %p75
      %p179 = pneg %p99
      %p180 = pneg %p96
      %p181 = pneg %p125
      %p182 = pneg %p122
      %p183 = scmp.lt.s32.totalorder %s15, 1
      %s184 = scalar_select %p183, %s15, 1
      %s185 = smul.addr %s184, 8
      %s186 = scalar_lea.vmem %s4, %s185
      %p187 = scmp.lt.s32.totalorder %s15, 1
      %s188 = scalar_select %p187, %s15, 1
      %s189 = smul.addr %s188, 2
      %s190 = smul.addr %s189, 2
      %s191 = scalar_lea.vmem %s0, %s190
      %p192 = scmp.lt.s32.totalorder %s15, 1
      %s193 = scalar_select %p192, %s15, 1
      %s194 = smul.addr %s193, 8
      %s195 = scalar_lea.vmem %s4, %s194
      %v196 = vld [vmem:[%s1] sm:$0xf]
      %v197 = vld [vmem:[%s1 + $0x4] sm:$0xf]
      %v198 = vld [vmem:[%s1 + $0x8] sm:$0xf]
      %v199 = vld [vmem:[%s1 + $0xc] sm:$0xf]
      %v200 = vld [vmem:[%s1 + $0x10] sm:$0xf]
      %v201 = vld [vmem:[%s1 + $0x14] sm:$0xf]
      %v202 = vld [vmem:[%s1 + $0x18] sm:$0xf]
      %v203 = vld [vmem:[%s1 + $0x1c] sm:$0xf]
      %v204 = vld [vmem:[%s1 + $0x20] sm:$0xf]
      %v205 = vld [vmem:[%s1 + $0x24] sm:$0xf]
      %v206 = vld [vmem:[%s1 + $0x28] sm:$0xf]
      %v207 = vld [vmem:[%s1 + $0x2c] sm:$0xf]
      %v208 = vld [vmem:[%s1 + $0x30] sm:$0xf]
      %v209 = vld [vmem:[%s1 + $0x34] sm:$0xf]
      %v210 = vld [vmem:[%s1 + $0x38] sm:$0xf]
      %v211 = vld [vmem:[%s1 + $0x3c] sm:$0xf]
      %v212 = vld [vmem:[%s1 + $0x40] sm:$0xf]
      %v213 = vld [vmem:[%s1 + $0x44] sm:$0xf]
      %v214 = vld [vmem:[%s1 + $0x48] sm:$0xf]
      %v215 = vld [vmem:[%s1 + $0x4c] sm:$0xf]
      %v216 = vld [vmem:[%s1 + $0x50] sm:$0xf]
      %v217 = vld [vmem:[%s1 + $0x54] sm:$0xf]
      %v218 = vld [vmem:[%s1 + $0x58] sm:$0xf]
      %v219 = vld [vmem:[%s1 + $0x5c] sm:$0xf]
      %v220 = vld [vmem:[%s1 + $0x60] sm:$0xf]
      %v221 = vld [vmem:[%s1 + $0x64] sm:$0xf]
      %v222 = vld [vmem:[%s1 + $0x68] sm:$0xf]
      %v223 = vld [vmem:[%s1 + $0x6c] sm:$0xf]
      %v224 = vld [vmem:[%s1 + $0x70] sm:$0xf]
      %v225 = vld [vmem:[%s1 + $0x74] sm:$0xf]
      %v226 = vld [vmem:[%s1 + $0x78] sm:$0xf]
      %v227 = vld [vmem:[%s1 + $0x7c] sm:$0xf]
      %v228 = vld [vmem:[%s2] sm:$0xf]
      %v229 = vld [vmem:[%s3] sm:$0x1]
      %v230 = vld [vmem:[%s191] sm:$0xf]
      %232 = vst [vmem:[#allocation1] ss:$4 sm:$0xff] %v230
      %v233 = vld.sshfl [vmem:[#allocation1] sm:$0xff pattern:$0x73625140]
      %v234 = vld.sshfl [vmem:[#allocation1 + $0x8] sm:$0xff pattern:$0x73625140]
      %v269 = vunpack.c.l.b16 %v196
      %v270 = vunpack.c.l.b16 %v197
      %v271 = vunpack.c.l.b16 %v198
      %v272 = vunpack.c.l.b16 %v199
      %v273 = vunpack.c.l.b16 %v200
      %v274 = vunpack.c.l.b16 %v201
      %v275 = vunpack.c.l.b16 %v202
      %v276 = vunpack.c.l.b16 %v203
      %v277 = vunpack.c.l.b16 %v204
      %v278 = vunpack.c.l.b16 %v205
      %v279 = vunpack.c.l.b16 %v206
      %v280 = vunpack.c.l.b16 %v207
      %v281 = vunpack.c.l.b16 %v208
      %v282 = vunpack.c.l.b16 %v209
      %v283 = vunpack.c.l.b16 %v210
      %v284 = vunpack.c.l.b16 %v211
      %v285 = vunpack.c.l.b16 %v212
      %v286 = vunpack.c.l.b16 %v213
      %v287 = vunpack.c.l.b16 %v214
      %v288 = vunpack.c.l.b16 %v215
      %v289 = vunpack.c.l.b16 %v216
      %v290 = vunpack.c.l.b16 %v217
      %v291 = vunpack.c.l.b16 %v218
      %v292 = vunpack.c.l.b16 %v219
      %v293 = vunpack.c.l.b16 %v220
      %v294 = vunpack.c.l.b16 %v221
      %v295 = vunpack.c.l.b16 %v222
      %v296 = vunpack.c.l.b16 %v223
      %v297 = vunpack.c.l.b16 %v224
      %v298 = vunpack.c.l.b16 %v225
      %v299 = vunpack.c.l.b16 %v226
      %v300 = vunpack.c.l.b16 %v227
      %v301 = vpack.c.b16 %v270, %v269
      %v302 = vpack.c.b16 %v272, %v271
      %v303 = vpack.c.b16 %v274, %v273
      %v304 = vpack.c.b16 %v276, %v275
      %v305 = vpack.c.b16 %v278, %v277
      %v306 = vpack.c.b16 %v280, %v279
      %v307 = vpack.c.b16 %v282, %v281
      %v308 = vpack.c.b16 %v284, %v283
      %v309 = vpack.c.b16 %v286, %v285
      %v310 = vpack.c.b16 %v288, %v287
      %v311 = vpack.c.b16 %v290, %v289
      %v312 = vpack.c.b16 %v292, %v291
      %v313 = vpack.c.b16 %v294, %v293
      %v314 = vpack.c.b16 %v296, %v295
      %v315 = vpack.c.b16 %v298, %v297
      %v316 = vpack.c.b16 %v300, %v299
      %333 = vmatpush.bf16.msra.mxu0 %v308
      %334 = vmatpush.bf16.msra.mxu0 %v307
      %335 = vmatpush.bf16.msra.mxu0 %v306
      %336 = vmatpush.bf16.msra.mxu0 %v305
      %337 = vmatpush.bf16.msra.mxu0 %v304
      %338 = vmatpush.bf16.msra.mxu0 %v303
      %339 = vmatpush.bf16.msra.mxu0 %v302
      %340 = vmatpush.bf16.msra.mxu0 %v301
      %341 = vmatmul.bf16.gmra.mxu0 %v233
      %v342 = vpop.f32.mrf.mxu0
      %v343 = vadd.f32 %v228, %v342
      %v344 = vpop.f32.mrf.mxu0
      %345 = vdwg.mxu0
      %346 = vmatpush.bf16.msra.mxu0 %v316
      %347 = vmatpush.bf16.msra.mxu0 %v315
      %348 = vmatpush.bf16.msra.mxu0 %v314
      %349 = vmatpush.bf16.msra.mxu0 %v313
      %350 = vmatpush.bf16.msra.mxu0 %v312
      %351 = vmatpush.bf16.msra.mxu0 %v311
      %352 = vmatpush.bf16.msra.mxu0 %v310
      %353 = vmatpush.bf16.msra.mxu0 %v309
      %354 = vmatmul.bf16.gmra.mxu0 %v234
      %v355 = vpop.f32.mrf.mxu0
      %v356 = vadd.f32 %v343, %v355
      %v357 = vpop.f32.mrf.mxu0
      %358 = vdwg.mxu0
      %vm359 = vcmask 257024
      %360 = vst.msk [vmem:[%s195] sm:$0xf] %vm359, %v356
      %vm361 = vcmask 253952
      %362 = vst.msk [vmem:[%s195 + $0x4] sm:$0x1] %vm361, %v229
      %p363 = scmp.lt.s32.totalorder %s15, 1
      %s364 = scalar_select %p363, %s15, 1
      %s365 = smul.addr %s364, 8
      %s366 = scalar_lea.vmem %s4, %s365
      // Predicated region
      $region37: #{vit_input_layer.1} parent=35 // pred_check
        %p367 = pneg %p122
      $region38: #{vit_input_layer.1} parent=35 // pred_check_branch
        %369 = sbr.rel (%p367) target = $region40
      $region39: #{vit_input_layer.1} parent=35 // pred_region
        _
      $region40: #{vit_input_layer.1} parent=35 // pred_fallthru
        _
    $region36: #{vit_input_layer.1} parent=5 // pred_fallthru
      _
    %p370 = scmp.le.s32.totalorder 2, %s10
    // Predicated region
    $region41: #{vit_input_layer.1} parent=5 // pred_check
      %p371 = pneg %p370
    $region42: #{vit_input_layer.1} parent=5 // pred_check_branch
      %373 = sbr.rel (%p371) target = $region44
    $region43: #{vit_input_layer.1} parent=5 // pred_region
      %s374 = ssub.s32 %s10, 2
      // Predicated region
      $region45: #{vit_input_layer.1} parent=43 // pred_check
        %p375 = pneg %p128
      $region46: #{vit_input_layer.1} parent=43 // pred_check_branch
        %377 = sbr.rel (%p375) target = $region48
      $region47: #{vit_input_layer.1} parent=43 // pred_region
        %p378 = scmp.lt.s32.totalorder %s16, 1
        %s379 = scalar_select %p378, %s16, 1
        %s380 = smul.addr %s379, 8
        %s381 = scalar_lea.vmem %s4, %s380
      $region48: #{vit_input_layer.1} parent=43 // pred_fallthru
        _
    $region44: #{vit_input_layer.1} parent=5 // pred_fallthru
      _
  $region6: #{vit_input_layer.1} parent=0 // loop_footer
    %s14 = sadd.s32 1, %s10
  $region7: #{vit_input_layer.1} parent=0 // loop_footer_branch
    %9 = sbr.rel target = $region3
  $region8: #{vit_input_layer.1} parent=0 // loop_exit
    _

// kernel: vit_input_layer.1
$region0: #{vit_input_layer.1}
  #allocation0 [shape = 'u32[]', space=smem, size = 0x4, offset = 0x4, fixed_abs, tag = 'smem constant byte address 0x4 - core index']
  #allocation1 [shape = 'u32[72,128]{1,0:T(1,128)}', space=vmem, size = 0x9000, scoped, tag = 'internal scratch']
  %s0 = inlined_call_operand.vmem [shape: bf16[2,4,256], index: 0, kind: input, shape index: {}]
  %s1 = inlined_call_operand.vmem [shape: bf16[256,32], index: 1, kind: input, shape index: {}]
  %s2 = inlined_call_operand.vmem [shape: f32[4,32], index: 2, kind: input, shape index: {}]
  %s3 = inlined_call_operand.vmem [shape: f32[1,32], index: 3, kind: input, shape index: {}]
  %s4 = inlined_call_operand.vmem [shape: f32[2,5,32], index: 4, kind: output, shape index: {}]
  %s5 = sld [smem:[#allocation0]]
  $region49: #{vit_input_layer.1} parent=0
    _
  %s7 = ssub.s32 1, %s5
  %s8 = scalar_select 0, %s7, %s5
  loop: start=0, step=1, limit=4
  $region2: #{vit_input_layer.1} parent=0 // loop_pre_header
    _
  $region3: #{vit_input_layer.1} parent=0 // loop_header
    %s10 = sphi 0, %s14
    %p11 = scmp.ge.s32.totalorder %s10, 4
    %s20 = sphi 0, %s22
    %s23 = sphi 0, %s20
    %s24 = sphi 0, %s23
    %s40 = sphi 0, %s24
    %s44 = sphi 0, %s44
    %s46 = sphi 0, %s44
    %s47 = sphi 0, %s46
    %s61 = sphi 0, %s47
    %s65 = sphi 0, %s65
    %s67 = sphi 0, %s65
    %s68 = sphi 0, %s67
    %s82 = sphi 0, %s68
    %s86 = sphi 0, %s86
    %s88 = sphi 0, %s86
    %s89 = sphi 0, %s88
    %s103 = sphi 0, %s89
    %s109 = sphi 0, %s111
    %s112 = sphi 0, %s109
    %s113 = sphi 0, %s112
    %s129 = sphi 0, %s113
  $region4: #{vit_input_layer.1} parent=0 // loop_header_branch
    %13 = sbr.rel (%p11) target = $region8
  $region5: #{vit_input_layer.1} parent=0 // loop_body
    %s15 = ssub.s32 %s10, 1
    %s16 = ssub.s32 %s10, 2
    %s17 = sadd.s32 %s10, 1
    %s18 = ssub.s32 %s10, %s17
    %p19 = scmp.eq.s32.totalorder %s18, 0
    %s21 = sadd.s32 %s20, 1
    %s22 = scalar_select %p19, %s20, %s21
    %p25 = pneg %p19
    %p26 = scmp.eq.s32.totalorder %s10, 1
    %p27 = por %p25, %p26
    %p28 = scmp.ne.s32.totalorder %s20, %s23
    %p29 = scmp.eq.s32.totalorder %s10, 0
    %p30 = por %p28, %p29
    %p31 = scmp.ne.s32.totalorder %s20, %s23
    %p32 = scmp.eq.s32.totalorder %s15, 1
    %p33 = por %p31, %p32
    %p34 = scmp.ne.s32.totalorder %s23, %s24
    %p35 = scmp.eq.s32.totalorder %s15, 0
    %p36 = por %p34, %p35
    %p37 = scmp.ne.s32.totalorder %s23, %s24
    %p38 = scmp.eq.s32.totalorder %s16, 1
    %p39 = por %p37, %p38
    %p41 = scmp.ne.s32.totalorder %s24, %s40
    %p42 = scmp.eq.s32.totalorder %s16, 0
    %p43 = por %p41, %p42
    %s45 = sadd.s32 %s44, 1
    %p48 = scmp.eq.s32.totalorder %s10, 1
    %p49 = scmp.ne.s32.totalorder %s44, %s46
    %p50 = scmp.eq.s32.totalorder %s10, 0
    %p51 = por %p49, %p50
    %p52 = scmp.ne.s32.totalorder %s44, %s46
    %p53 = scmp.eq.s32.totalorder %s15, 1
    %p54 = por %p52, %p53
    %p55 = scmp.ne.s32.totalorder %s46, %s47
    %p56 = scmp.eq.s32.totalorder %s15, 0
    %p57 = por %p55, %p56
    %p58 = scmp.ne.s32.totalorder %s46, %s47
    %p59 = scmp.eq.s32.totalorder %s16, 1
    %p60 = por %p58, %p59
    %p62 = scmp.ne.s32.totalorder %s47, %s61
    %p63 = scmp.eq.s32.totalorder %s16, 0
    %p64 = por %p62, %p63
    %s66 = sadd.s32 %s65, 1
    %p69 = scmp.eq.s32.totalorder %s10, 1
    %p70 = scmp.ne.s32.totalorder %s65, %s67
    %p71 = scmp.eq.s32.totalorder %s10, 0
    %p72 = por %p70, %p71
    %p73 = scmp.ne.s32.totalorder %s65, %s67
    %p74 = scmp.eq.s32.totalorder %s15, 1
    %p75 = por %p73, %p74
    %p76 = scmp.ne.s32.totalorder %s67, %s68
    %p77 = scmp.eq.s32.totalorder %s15, 0
    %p78 = por %p76, %p77
    %p79 = scmp.ne.s32.totalorder %s67, %s68
    %p80 = scmp.eq.s32.totalorder %s16, 1
    %p81 = por %p79, %p80
    %p83 = scmp.ne.s32.totalorder %s68, %s82
    %p84 = scmp.eq.s32.totalorder %s16, 0
    %p85 = por %p83, %p84
    %s87 = sadd.s32 %s86, 1
    %p90 = scmp.eq.s32.totalorder %s10, 1
    %p91 = scmp.ne.s32.totalorder %s86, %s88
    %p92 = scmp.eq.s32.totalorder %s10, 0
    %p93 = por %p91, %p92
    %p94 = scmp.ne.s32.totalorder %s86, %s88
    %p95 = scmp.eq.s32.totalorder %s15, 1
    %p96 = por %p94, %p95
    %p97 = scmp.ne.s32.totalorder %s88, %s89
    %p98 = scmp.eq.s32.totalorder %s15, 0
    %p99 = por %p97, %p98
    %p100 = scmp.ne.s32.totalorder %s88, %s89
    %p101 = scmp.eq.s32.totalorder %s16, 1
    %p102 = por %p100, %p101
    %p104 = scmp.ne.s32.totalorder %s89, %s103
    %p105 = scmp.eq.s32.totalorder %s16, 0
    %p106 = por %p104, %p105
    %s107 = ssub.s32 %s10, %s17
    %p108 = scmp.eq.s32.totalorder %s107, 0
    %s110 = sadd.s32 %s109, 1
    %s111 = scalar_select %p108, %s109, %s110
    %p114 = pneg %p108
    %p115 = scmp.eq.s32.totalorder %s10, 1
    %p116 = por %p114, %p115
    %p117 = scmp.ne.s32.totalorder %s109, %s112
    %p118 = scmp.eq.s32.totalorder %s10, 0
    %p119 = por %p117, %p118
    %p120 = scmp.ne.s32.totalorder %s109, %s112
    %p121 = scmp.eq.s32.totalorder %s15, 1
    %p122 = por %p120, %p121
    %p123 = scmp.ne.s32.totalorder %s112, %s113
    %p124 = scmp.eq.s32.totalorder %s15, 0
    %p125 = por %p123, %p124
    %p126 = scmp.ne.s32.totalorder %s112, %s113
    %p127 = scmp.eq.s32.totalorder %s16, 1
    %p128 = por %p126, %p127
    %p130 = scmp.ne.s32.totalorder %s113, %s129
    %p131 = scmp.eq.s32.totalorder %s16, 0
    %p132 = por %p130, %p131
    %p133 = scmp.le.s32.totalorder 1, %s10
    %p134 = scmp.lt.s32.totalorder %s10, 3
    %p135 = pnand %p133, %p134
    %p136 = pneg %p135
    // Predicated region
    $region9: #{vit_input_layer.1} parent=5 // pred_check
      _
    $region10: #{vit_input_layer.1} parent=5 // pred_check_branch
      %138 = sbr.rel (%p135) target = $region12
    $region11: #{vit_input_layer.1} parent=5 // pred_region
      %s139 = ssub.s32 %s10, 1
      // Predicated region
      $region13: #{vit_input_layer.1} parent=11 // pred_check
        %p140 = pneg %p57
      $region14: #{vit_input_layer.1} parent=11 // pred_check_branch
        %142 = sbr.rel (%p140) target = $region16
      $region15: #{vit_input_layer.1} parent=11 // pred_region
        _
      $region16: #{vit_input_layer.1} parent=11 // pred_fallthru
        _
      // Predicated region
      $region17: #{vit_input_layer.1} parent=11 // pred_check
        %p143 = pneg %p78
      $region18: #{vit_input_layer.1} parent=11 // pred_check_branch
        %145 = sbr.rel (%p143) target = $region20
      $region19: #{vit_input_layer.1} parent=11 // pred_region
        _
      $region20: #{vit_input_layer.1} parent=11 // pred_fallthru
        _
      // Predicated region
      $region21: #{vit_input_layer.1} parent=11 // pred_check
        %p146 = pneg %p99
      $region22: #{vit_input_layer.1} parent=11 // pred_check_branch
        %148 = sbr.rel (%p146) target = $region24
      $region23: #{vit_input_layer.1} parent=11 // pred_region
        _
      $region24: #{vit_input_layer.1} parent=11 // pred_fallthru
        _
    $region12: #{vit_input_layer.1} parent=5 // pred_fallthru
      _
    %p149 = scmp.lt.s32.totalorder %s10, 2
    // Predicated region
    $region25: #{vit_input_layer.1} parent=5 // pred_check
      %p150 = pneg %p149
    $region26: #{vit_input_layer.1} parent=5 // pred_check_branch
      %152 = sbr.rel (%p150) target = $region28
    $region27: #{vit_input_layer.1} parent=5 // pred_region
      // Predicated region
      $region29: #{vit_input_layer.1} parent=27 // pred_check
        %p153 = pneg %p30
      $region30: #{vit_input_layer.1} parent=27 // pred_check_branch
        %155 = sbr.rel (%p153) target = $region32
      $region31: #{vit_input_layer.1} parent=27 // pred_region
        %p156 = scmp.lt.s32.totalorder %s10, 1
        %s157 = scalar_select %p156, %s10, 1
        %s158 = smul.addr %s157, 2
        %s159 = smul.addr %s158, 2
        %s160 = scalar_lea.vmem %s0, %s159
      $region32: #{vit_input_layer.1} parent=27 // pred_fallthru
        _
    $region28: #{vit_input_layer.1} parent=5 // pred_fallthru
      _
    %p161 = scmp.le.s32.totalorder 1, %s10
    %p162 = scmp.lt.s32.totalorder %s10, 3
    %p163 = pnand %p161, %p162
    %p164 = pneg %p163
    // Predicated region
    $region33: #{vit_input_layer.1} parent=5 // pred_check
      _
    $region34: #{vit_input_layer.1} parent=5 // pred_check_branch
      %166 = sbr.rel (%p163) target = $region36
    $region35: #{vit_input_layer.1} parent=5 // pred_region
      %s167 = ssub.s32 %s10, 1
      %p168 = scmp.lt.s32.totalorder %s15, 1
      %s169 = scalar_select %p168, %s15, 1
      %s170 = smul.addr %s169, 2
      %s171 = smul.addr %s170, 2
      %s172 = scalar_lea.vmem %s0, %s171
      %p173 = pneg %p36
      %p174 = pneg %p33
      %p175 = pneg %p57
      %p176 = pneg %p54
      %p177 = pneg %p78
      %p178 = pneg %p75
      %p179 = pneg %p99
      %p180 = pneg %p96
      %p181 = pneg %p125
      %p182 = pneg %p122
      %p183 = scmp.lt.s32.totalorder %s15, 1
      %s184 = scalar_select %p183, %s15, 1
      %s185 = smul.addr %s184, 8
      %s186 = scalar_lea.vmem %s4, %s185
      %p187 = scmp.lt.s32.totalorder %s15, 1
      %s188 = scalar_select %p187, %s15, 1
      %s189 = smul.addr %s188, 2
      %s190 = smul.addr %s189, 2
      %s191 = scalar_lea.vmem %s0, %s190
      %p192 = scmp.lt.s32.totalorder %s15, 1
      %s193 = scalar_select %p192, %s15, 1
      %s194 = smul.addr %s193, 8
      %s195 = scalar_lea.vmem %s4, %s194
      %v196 = vld [vmem:[%s1] sm:$0xf]
      %v197 = vld [vmem:[%s1 + $0x4] sm:$0xf]
      %v198 = vld [vmem:[%s1 + $0x8] sm:$0xf]
      %v199 = vld [vmem:[%s1 + $0xc] sm:$0xf]
      %v200 = vld [vmem:[%s1 + $0x10] sm:$0xf]
      %v201 = vld [vmem:[%s1 + $0x14] sm:$0xf]
      %v202 = vld [vmem:[%s1 + $0x18] sm:$0xf]
      %v203 = vld [vmem:[%s1 + $0x1c] sm:$0xf]
      %v204 = vld [vmem:[%s1 + $0x20] sm:$0xf]
      %v205 = vld [vmem:[%s1 + $0x24] sm:$0xf]
      %v206 = vld [vmem:[%s1 + $0x28] sm:$0xf]
      %v207 = vld [vmem:[%s1 + $0x2c] sm:$0xf]
      %v208 = vld [vmem:[%s1 + $0x30] sm:$0xf]
      %v209 = vld [vmem:[%s1 + $0x34] sm:$0xf]
      %v210 = vld [vmem:[%s1 + $0x38] sm:$0xf]
      %v211 = vld [vmem:[%s1 + $0x3c] sm:$0xf]
      %v212 = vld [vmem:[%s1 + $0x40] sm:$0xf]
      %v213 = vld [vmem:[%s1 + $0x44] sm:$0xf]
      %v214 = vld [vmem:[%s1 + $0x48] sm:$0xf]
      %v215 = vld [vmem:[%s1 + $0x4c] sm:$0xf]
      %v216 = vld [vmem:[%s1 + $0x50] sm:$0xf]
      %v217 = vld [vmem:[%s1 + $0x54] sm:$0xf]
      %v218 = vld [vmem:[%s1 + $0x58] sm:$0xf]
      %v219 = vld [vmem:[%s1 + $0x5c] sm:$0xf]
      %v220 = vld [vmem:[%s1 + $0x60] sm:$0xf]
      %v221 = vld [vmem:[%s1 + $0x64] sm:$0xf]
      %v222 = vld [vmem:[%s1 + $0x68] sm:$0xf]
      %v223 = vld [vmem:[%s1 + $0x6c] sm:$0xf]
      %v224 = vld [vmem:[%s1 + $0x70] sm:$0xf]
      %v225 = vld [vmem:[%s1 + $0x74] sm:$0xf]
      %v226 = vld [vmem:[%s1 + $0x78] sm:$0xf]
      %v227 = vld [vmem:[%s1 + $0x7c] sm:$0xf]
      %v228 = vld [vmem:[%s2] sm:$0xf]
      %v229 = vld [vmem:[%s3] sm:$0x1]
      %v230 = vld [vmem:[%s191] sm:$0xf]
      %232 = vst [vmem:[#allocation1] ss:$4 sm:$0xff] %v230
      %v233 = vld.sshfl [vmem:[#allocation1] sm:$0xff pattern:$0x73625140]
      %v234 = vld.sshfl [vmem:[#allocation1 + $0x8] sm:$0xff pattern:$0x73625140]
      %v269 = vunpack.c.l.b16 %v196
      %v270 = vunpack.c.l.b16 %v197
      %v271 = vunpack.c.l.b16 %v198
      %v272 = vunpack.c.l.b16 %v199
      %v273 = vunpack.c.l.b16 %v200
      %v274 = vunpack.c.l.b16 %v201
      %v275 = vunpack.c.l.b16 %v202
      %v276 = vunpack.c.l.b16 %v203
      %v277 = vunpack.c.l.b16 %v204
      %v278 = vunpack.c.l.b16 %v205
      %v279 = vunpack.c.l.b16 %v206
      %v280 = vunpack.c.l.b16 %v207
      %v281 = vunpack.c.l.b16 %v208
      %v282 = vunpack.c.l.b16 %v209
      %v283 = vunpack.c.l.b16 %v210
      %v284 = vunpack.c.l.b16 %v211
      %v285 = vunpack.c.l.b16 %v212
      %v286 = vunpack.c.l.b16 %v213
      %v287 = vunpack.c.l.b16 %v214
      %v288 = vunpack.c.l.b16 %v215
      %v289 = vunpack.c.l.b16 %v216
      %v290 = vunpack.c.l.b16 %v217
      %v291 = vunpack.c.l.b16 %v218
      %v292 = vunpack.c.l.b16 %v219
      %v293 = vunpack.c.l.b16 %v220
      %v294 = vunpack.c.l.b16 %v221
      %v295 = vunpack.c.l.b16 %v222
      %v296 = vunpack.c.l.b16 %v223
      %v297 = vunpack.c.l.b16 %v224
      %v298 = vunpack.c.l.b16 %v225
      %v299 = vunpack.c.l.b16 %v226
      %v300 = vunpack.c.l.b16 %v227
      %v301 = vpack.c.b16 %v270, %v269
      %v302 = vpack.c.b16 %v272, %v271
      %v303 = vpack.c.b16 %v274, %v273
      %v304 = vpack.c.b16 %v276, %v275
      %v305 = vpack.c.b16 %v278, %v277
      %v306 = vpack.c.b16 %v280, %v279
      %v307 = vpack.c.b16 %v282, %v281
      %v308 = vpack.c.b16 %v284, %v283
      %v309 = vpack.c.b16 %v286, %v285
      %v310 = vpack.c.b16 %v288, %v287
      %v311 = vpack.c.b16 %v290, %v289
      %v312 = vpack.c.b16 %v292, %v291
      %v313 = vpack.c.b16 %v294, %v293
      %v314 = vpack.c.b16 %v296, %v295
      %v315 = vpack.c.b16 %v298, %v297
      %v316 = vpack.c.b16 %v300, %v299
      %333 = vmatpush.bf16.msra.mxu0 %v308
      %334 = vmatpush.bf16.msra.mxu0 %v307
      %335 = vmatpush.bf16.msra.mxu0 %v306
      %336 = vmatpush.bf16.msra.mxu0 %v305
      %337 = vmatpush.bf16.msra.mxu0 %v304
      %338 = vmatpush.bf16.msra.mxu0 %v303
      %339 = vmatpush.bf16.msra.mxu0 %v302
      %340 = vmatpush.bf16.msra.mxu0 %v301
      %341 = vmatmul.bf16.gmra.mxu0 %v233
      %v342 = vpop.f32.mrf.mxu0
      %v343 = vadd.f32 %v228, %v342
      %v344 = vpop.f32.mrf.mxu0
      %345 = vdwg.mxu0
      %346 = vmatpush.bf16.msra.mxu0 %v316
      %347 = vmatpush.bf16.msra.mxu0 %v315
      %348 = vmatpush.bf16.msra.mxu0 %v314
      %349 = vmatpush.bf16.msra.mxu0 %v313
      %350 = vmatpush.bf16.msra.mxu0 %v312
      %351 = vmatpush.bf16.msra.mxu0 %v311
      %352 = vmatpush.bf16.msra.mxu0 %v310
      %353 = vmatpush.bf16.msra.mxu0 %v309
      %354 = vmatmul.bf16.gmra.mxu0 %v234
      %v355 = vpop.f32.mrf.mxu0
      %v356 = vadd.f32 %v343, %v355
      %v357 = vpop.f32.mrf.mxu0
      %358 = vdwg.mxu0
      %vm359 = vcmask 257024
      %360 = vst.msk [vmem:[%s195] sm:$0xf] %vm359, %v356
      %vm361 = vcmask 253952
      %362 = vst.msk [vmem:[%s195 + $0x4] sm:$0x1] %vm361, %v229
      %p363 = scmp.lt.s32.totalorder %s15, 1
      %s364 = scalar_select %p363, %s15, 1
      %s365 = smul.addr %s364, 8
      %s366 = scalar_lea.vmem %s4, %s365
      // Predicated region
      $region37: #{vit_input_layer.1} parent=35 // pred_check
        %p367 = pneg %p122
      $region38: #{vit_input_layer.1} parent=35 // pred_check_branch
        %369 = sbr.rel (%p367) target = $region40
      $region39: #{vit_input_layer.1} parent=35 // pred_region
        _
      $region40: #{vit_input_layer.1} parent=35 // pred_fallthru
        _
    $region36: #{vit_input_layer.1} parent=5 // pred_fallthru
      _
    %p370 = scmp.le.s32.totalorder 2, %s10
    // Predicated region
    $region41: #{vit_input_layer.1} parent=5 // pred_check
      %p371 = pneg %p370
    $region42: #{vit_input_layer.1} parent=5 // pred_check_branch
      %373 = sbr.rel (%p371) target = $region44
    $region43: #{vit_input_layer.1} parent=5 // pred_region
      %s374 = ssub.s32 %s10, 2
      // Predicated region
      $region45: #{vit_input_layer.1} parent=43 // pred_check
        %p375 = pneg %p128
      $region46: #{vit_input_layer.1} parent=43 // pred_check_branch
        %377 = sbr.rel (%p375) target = $region48
      $region47: #{vit_input_layer.1} parent=43 // pred_region
        %p378 = scmp.lt.s32.totalorder %s16, 1
        %s379 = scalar_select %p378, %s16, 1
        %s380 = smul.addr %s379, 8
        %s381 = scalar_lea.vmem %s4, %s380
      $region48: #{vit_input_layer.1} parent=43 // pred_fallthru
        _
    $region44: #{vit_input_layer.1} parent=5 // pred_fallthru
      _
  $region6: #{vit_input_layer.1} parent=0 // loop_footer
    %s14 = sadd.s32 1, %s10
  $region7: #{vit_input_layer.1} parent=0 // loop_footer_branch
    %9 = sbr.rel target = $region3
  $region8: #{vit_input_layer.1} parent=0 // loop_exit
    _

</llo_original>
